<compile_context>
chip_gen: v6e
topology: v6e:2x2x1
jax: 0.10.0
libtpu: 0.0.40
codegen_flags: <defaults>
</compile_context>

<pallas_src>
import functools
from itertools import permutations

import numpy as np
import jax
import jax.numpy as jnp
from jax.experimental import pallas as pl
from jax.experimental.pallas import tpu as pltpu

try:  # scipy is preferred; a brute-force fallback keeps the script standalone
    from scipy.optimize import linear_sum_assignment as _scipy_lsa
except Exception:  # pragma: no cover
    _scipy_lsa = None


# --------------------------------------------------------------------------
# Pallas kernel: one tile of the (N_pad, T_pad) matching-cost matrix
# --------------------------------------------------------------------------
def _cost_kernel(cls_ref, oh_ref, pbox_ref, tbox_ref, out_ref, *,
                 w_class, w_bbox, w_giou):
    tn, tt = out_ref.shape

    # ---- class cost: gather expressed as a one-hot matmul (MXU) -----------
    cls_term = jnp.dot(cls_ref[...], oh_ref[...],
                       preferred_element_type=jnp.float32)        # (TN, TT)

    d = pbox_ref[...]            # (TN, 4) cxcywh, predictions on sublanes
    t = tbox_ref[...]            # (4, TT) cxcywh, targets on lanes

    dcx, dcy, dw, dh = d[:, 0:1], d[:, 1:2], d[:, 2:3], d[:, 3:4]  # (TN, 1)
    tcx, tcy, tw, th = t[0:1, :], t[1:2, :], t[2:3, :], t[3:4, :]  # (1, TT)

    # narrow per-prediction corners / area (cheap (TN, 1) arithmetic)
    dx0 = dcx - 0.5 * dw
    dy0 = dcy - 0.5 * dh
    dx1 = dcx + 0.5 * dw
    dy1 = dcy + 0.5 * dh
    area_d = dw * dh

    # per-target corners / area (row vectors; sublane broadcast is cheap)
    tx0 = tcx - 0.5 * tw
    ty0 = tcy - 0.5 * th
    tx1 = tcx + 0.5 * tw
    ty1 = tcy + 0.5 * th
    area_t = tw * th

    # hoist each lane-broadcast of the (TN, 1) columns ONCE, then reuse
    shape = (tn, tt)
    bdcx = jnp.broadcast_to(dcx, shape)
    bdcy = jnp.broadcast_to(dcy, shape)
    bdw = jnp.broadcast_to(dw, shape)
    bdh = jnp.broadcast_to(dh, shape)
    bdx0 = jnp.broadcast_to(dx0, shape)
    bdy0 = jnp.broadcast_to(dy0, shape)
    bdx1 = jnp.broadcast_to(dx1, shape)
    bdy1 = jnp.broadcast_to(dy1, shape)
    barea_d = jnp.broadcast_to(area_d, shape)

    # L1 cdist in cxcywh space (== torch.cdist(p=1))
    c_bbox = (jnp.abs(bdcx - tcx) + jnp.abs(bdcy - tcy)
              + jnp.abs(bdw - tw) + jnp.abs(bdh - th))

    # intersection / union
    lt_x = jnp.maximum(bdx0, tx0)
    lt_y = jnp.maximum(bdy0, ty0)
    rb_x = jnp.minimum(bdx1, tx1)
    rb_y = jnp.minimum(bdy1, ty1)
    inter = jnp.maximum(rb_x - lt_x, 0.0) * jnp.maximum(rb_y - lt_y, 0.0)
    union = barea_d + area_t - inter
    iou = inter * pl.reciprocal(union, approx=True)       # EUP, frees VALU

    # smallest enclosing box
    cx0 = jnp.minimum(bdx0, tx0)
    cy0 = jnp.minimum(bdy0, ty0)
    cx1 = jnp.maximum(bdx1, tx1)
    cy1 = jnp.maximum(bdy1, ty1)
    area_c = (cx1 - cx0) * (cy1 - cy0)
    giou = iou - (area_c - union) * pl.reciprocal(area_c, approx=True)

    out_ref[...] = w_bbox * c_bbox + w_class * cls_term + w_giou * (-giou)


# --------------------------------------------------------------------------
# Host wrapper: bucketed static padding + one batched pallas_call
# --------------------------------------------------------------------------
def _round_up(x, m):
    return ((x + m - 1) // m) * m


_N_BUCKETS = (8, 16, 32, 64, 128, 256)      # prediction rows (sublanes)
_T_BUCKETS = (128, 256, 512)                # target columns (lanes)
_DUMMY_BOX = np.array([0.5, 0.5, 1.0, 1.0], np.float32)


def _bucket(x, buckets, step):
    for b in buckets:
        if x <= b:
            return b
    return _round_up(x, step)


@functools.lru_cache(maxsize=None)
def _build_cost_fn(n_pad, t_pad, c_pad, tn, tt, w_class, w_bbox, w_giou):
    """Compile one cost-matrix kernel per (bucketed shape, weights) tuple."""
    kernel = functools.partial(_cost_kernel, w_class=w_class,
                               w_bbox=w_bbox, w_giou=w_giou)
    fn = pl.pallas_call(
        kernel,
        out_shape=jax.ShapeDtypeStruct((n_pad, t_pad), jnp.float32),
        grid=(n_pad // tn, t_pad // tt),
        in_specs=[
            pl.BlockSpec((tn, c_pad), lambda i, j: (i, 0)),   # per-class cost
            pl.BlockSpec((c_pad, tt), lambda i, j: (0, j)),   # one-hot labels
            pl.BlockSpec((tn, 4), lambda i, j: (i, 0)),       # pred boxes
            pl.BlockSpec((4, tt), lambda i, j: (0, j)),       # tgt boxes (T)
        ],
        out_specs=pl.BlockSpec((tn, tt), lambda i, j: (i, j)),
        compiler_params=pltpu.CompilerParams(
            # both grid axes are independent -> megacore sharding on v7x
            dimension_semantics=("parallel", "parallel")),
    )
    return jax.jit(fn)


def cost_matrix_pallas(class_cost, pred_boxes, tgt_ids, tgt_boxes,
                       cost_class=1.0, cost_bbox=1.0, cost_giou=1.0):
    """class_cost: (N, C) per-class classification cost (sign already baked);
    pred_boxes: (N, 4) cxcywh; tgt_ids: (T,) int labels; tgt_boxes: (T, 4).
    Returns the (N, T) matching-cost matrix as a device array."""
    class_cost = np.asarray(class_cost, np.float32)
    pred_boxes = np.asarray(pred_boxes, np.float32).reshape(-1, 4)
    tgt_ids = np.asarray(tgt_ids, np.int64).reshape(-1)
    tgt_boxes = np.asarray(tgt_boxes, np.float32).reshape(-1, 4)

    n, c = class_cost.shape
    t = tgt_boxes.shape[0]

    n_pad = _bucket(max(n, 1), _N_BUCKETS, 256)
    t_pad = _bucket(max(t, 1), _T_BUCKETS, 512)
    c_pad = max(128, _round_up(c, 128))
    # Tile caps: (256, 512) f32 blocks keep VMEM use far below the 64 MiB
    # v7x limit (and 128 MiB on v5e/v6e) while keeping stores lane-dense.
    tn = min(n_pad, 256)
    tt = min(t_pad, 512)

    # Host-side numpy padding to static bucketed shapes (compile once/bucket).
    cls_p = np.zeros((n_pad, c_pad), np.float32)
    cls_p[:n, :c] = class_cost
    onehot = np.zeros((c_pad, t_pad), np.float32)
    if t:
        onehot[tgt_ids, np.arange(t)] = 1.0
    pb = np.broadcast_to(_DUMMY_BOX, (n_pad, 4)).copy()
    pb[:n] = pred_boxes
    tb = np.broadcast_to(_DUMMY_BOX[:, None], (4, t_pad)).copy()
    if t:
        tb[:, :t] = tgt_boxes.T

    fn = _build_cost_fn(n_pad, t_pad, c_pad, tn, tt,
                        float(cost_class), float(cost_bbox), float(cost_giou))
    out = fn(cls_p, onehot, pb, tb)
    return out[:n, :t]


# --------------------------------------------------------------------------
# Host-side Hungarian assignment
# --------------------------------------------------------------------------
def _linear_sum_assignment(cost):
    cost = np.asarray(cost, np.float64)
    n, m = cost.shape
    if n == 0 or m == 0:
        return np.zeros((0,), np.int64), np.zeros((0,), np.int64)
    if _scipy_lsa is not None:
        r, c = _scipy_lsa(cost)
        return np.asarray(r, np.int64), np.asarray(c, np.int64)
    # TODO(synk): brute-force fallback is exponential; only suitable for the
    # tiny problems used here when scipy is unavailable.
    if n > m:
        cols, rows = _linear_sum_assignment(cost.T)
        order = np.argsort(rows)
        return rows[order], cols[order]
    rows = np.arange(n)
    best_perm, best_val = tuple(range(n)), np.inf
    for perm in permutations(range(m), n):
        val = cost[rows, list(perm)].sum()
        if val < best_val:
            best_val, best_perm = val, perm
    return rows.astype(np.int64), np.asarray(best_perm, np.int64)


# --------------------------------------------------------------------------
# HungarianMatcher (forward semantics of the PyTorch reference)
# --------------------------------------------------------------------------
class HungarianMatcherPallas:
    def __init__(self, cost_class=1.0, cost_bbox=1.0, cost_giou=1.0,
                 focal_loss=False, focal_alpha=0.25, focal_gamma=2.0):
        self.cost_class = float(cost_class)
        self.cost_bbox = float(cost_bbox)
        self.cost_giou = float(cost_giou)
        self.focal_loss = focal_loss
        self.focal_alpha = float(focal_alpha)
        self.focal_gamma = float(focal_gamma)
        assert cost_class != 0 or cost_bbox != 0 or cost_giou != 0, \
            "all costs cant be 0"

    # classification part of the cost per class (cheap elementwise precompute)
    def _class_cost_per_class(self, logits_flat):
        logits_flat = np.asarray(logits_flat, np.float32)
        if self.focal_loss:
            prob = 1.0 / (1.0 + np.exp(-logits_flat))
            neg = ((1.0 - self.focal_alpha) * prob ** self.focal_gamma
                   * -np.log(1.0 - prob + 1e-8))
            pos = (self.focal_alpha * (1.0 - prob) ** self.focal_gamma
                   * -np.log(prob + 1e-8))
            return (pos - neg).astype(np.float32)
        z = logits_flat - logits_flat.max(axis=-1, keepdims=True)
        e = np.exp(z)
        prob = e / e.sum(axis=-1, keepdims=True)
        return (-prob).astype(np.float32)

    def compute_cost_matrix(self, outputs, targets):
        """(batch, num_queries, total_targets) cost matrix before masking."""
        pred_logits = np.asarray(outputs['pred_logits'], np.float32)
        pred_boxes = np.asarray(outputs['pred_boxes'], np.float32)
        bs, nq, _ = pred_logits.shape

        sizes = [int(np.asarray(v['boxes']).reshape(-1, 4).shape[0])
                 for v in targets]
        total_t = int(sum(sizes))
        if total_t == 0:
            return np.zeros((bs, nq, 0), np.float32), sizes

        tgt_ids = np.concatenate(
            [np.asarray(v['labels']).reshape(-1) for v in targets]
        ).astype(np.int64)
        tgt_bbox = np.concatenate(
            [np.asarray(v['boxes'], np.float32).reshape(-1, 4)
             for v in targets])

        class_cost = self._class_cost_per_class(
            pred_logits.reshape(bs * nq, -1))
        out_bbox = pred_boxes.reshape(bs * nq, 4)

        # Single batched Pallas call + single host<->device sync.
        cost_dev = cost_matrix_pallas(
            class_cost, out_bbox, tgt_ids, tgt_bbox,
            self.cost_class, self.cost_bbox, self.cost_giou)
        cost_dev = jax.block_until_ready(cost_dev)
        cost = np.array(cost_dev).reshape(bs, nq, total_t)   # writable copy
        return cost, sizes

    def forward(self, outputs, targets):
        cost_matrix, sizes = self.compute_cost_matrix(outputs, targets)
        bs, nq, _ = cost_matrix.shape

        # track-query masking (host bookkeeping, identical to the reference)
        for i, target in enumerate(targets):
            if 'track_query_match_ids' not in target:
                continue
            prop_i = 0
            offset = int(sum(sizes[:i]))
            fal_pos_mask = np.asarray(target['track_queries_fal_pos_mask'],
                                      bool)
            tq_mask = np.asarray(target['track_queries_mask'], bool)
            match_ids = np.asarray(target['track_query_match_ids'],
                                   np.int64).reshape(-1)
            for j in range(nq):
                if fal_pos_mask[j]:
                    cost_matrix[i, j] = np.inf
                elif tq_mask[j]:
                    track_query_id = int(match_ids[prop_i])
                    prop_i += 1
                    cost_matrix[i, j] = np.inf
                    cost_matrix[i, :, track_query_id + offset] = np.inf
                    cost_matrix[i, j, track_query_id + offset] = -1

        splits = np.split(cost_matrix, np.cumsum(sizes)[:-1], axis=-1)
        indices = [_linear_sum_assignment(c[i]) for i, c in enumerate(splits)]
        return [(np.asarray(i, np.int64), np.asarray(j, np.int64))
                for i, j in indices]

    __call__ = forward


# --------------------------------------------------------------------------
# Reference (numpy) cost matrix, for the in-script correctness check
# --------------------------------------------------------------------------
def _cost_matrix_reference(class_cost, pred_boxes, tgt_ids, tgt_boxes,
                           w_class, w_bbox, w_giou):
    d = np.asarray(pred_boxes, np.float64).reshape(-1, 4)
    t = np.asarray(tgt_boxes, np.float64).reshape(-1, 4)
    cls_term = np.asarray(class_cost, np.float64)[:, np.asarray(tgt_ids,
                                                                np.int64)]
    c_bbox = np.abs(d[:, None, :] - t[None, :, :]).sum(-1)
    dx = np.stack([d[:, 0] - d[:, 2] / 2, d[:, 1] - d[:, 3] / 2,
                   d[:, 0] + d[:, 2] / 2, d[:, 1] + d[:, 3] / 2], -1)
    tx = np.stack([t[:, 0] - t[:, 2] / 2, t[:, 1] - t[:, 3] / 2,
                   t[:, 0] + t[:, 2] / 2, t[:, 1] + t[:, 3] / 2], -1)
    area_d = (dx[:, 2] - dx[:, 0]) * (dx[:, 3] - dx[:, 1])
    area_t = (tx[:, 2] - tx[:, 0]) * (tx[:, 3] - tx[:, 1])
    lt = np.maximum(dx[:, None, :2], tx[None, :, :2])
    rb = np.minimum(dx[:, None, 2:], tx[None, :, 2:])
    wh = np.clip(rb - lt, 0.0, None)
    inter = wh[..., 0] * wh[..., 1]
    union = area_d[:, None] + area_t[None, :] - inter
    iou = inter / union
    c_lt = np.minimum(dx[:, None, :2], tx[None, :, :2])
    c_rb = np.maximum(dx[:, None, 2:], tx[None, :, 2:])
    c_wh = np.clip(c_rb - c_lt, 0.0, None)
    area_c = c_wh[..., 0] * c_wh[..., 1]
    giou = iou - (area_c - union) / area_c
    return w_bbox * c_bbox + w_class * cls_term + w_giou * (-giou)


# --------------------------------------------------------------------------
# Demo / smoke test
# --------------------------------------------------------------------------
if __name__ == "__main__":
    key = jax.random.PRNGKey(0)
    kl, kb, kt0, kt1, kc0, kc1 = jax.random.split(key, 6)

    batch_size, num_queries, num_classes = 2, 8, 4
    sizes = [4, 3]

    pred_logits = jax.random.normal(
        kl, (batch_size, num_queries, num_classes), jnp.float32)

    def make_boxes(k, n):
        kc, ks = jax.random.split(k)
        centers = jax.random.uniform(kc, (n, 2), minval=0.25, maxval=0.75)
        wh = jax.random.uniform(ks, (n, 2), minval=0.1, maxval=0.3)
        return jnp.concatenate([centers, wh], axis=1).astype(jnp.float32)

    pred_boxes = make_boxes(kb, batch_size * num_queries).reshape(
        batch_size, num_queries, 4)
    tgt_boxes0 = make_boxes(kt0, sizes[0])
    tgt_boxes1 = make_boxes(kt1, sizes[1])
    labels0 = jax.random.randint(kc0, (sizes[0],), 0, num_classes)
    labels1 = jax.random.randint(kc1, (sizes[1],), 0, num_classes)

    outputs = {
        'pred_logits': np.asarray(pred_logits),
        'pred_boxes': np.asarray(pred_boxes),
    }
    targets = [
        {   # sample 0: queries 0,1 are track queries; query 2 is false-pos
            'boxes': np.asarray(tgt_boxes0),
            'labels': np.asarray(labels0),
            'track_queries_mask': np.array(
                [True, True, True, False, False, False, False, False]),
            'track_queries_fal_pos_mask': np.array(
                [False, False, True, False, False, False, False, False]),
            'track_query_match_ids': np.array([0, 2], np.int64),
        },
        {   # sample 1: plain detection targets, no track queries
            'boxes': np.asarray(tgt_boxes1),
            'labels': np.asarray(labels1),
        },
    ]

    matcher = HungarianMatcherPallas(cost_class=1.0, cost_bbox=5.0,
                                     cost_giou=2.0)

    # --- numeric check of the Pallas cost matrix vs a numpy reference ------
    tgt_ids_all = np.concatenate([np.asarray(t['labels']) for t in targets])
    tgt_bbox_all = np.concatenate([np.asarray(t['boxes']) for t in targets])
    class_cost = matcher._class_cost_per_class(
        np.asarray(pred_logits).reshape(batch_size * num_queries, num_classes))
    cost_dev = cost_matrix_pallas(
        class_cost, np.asarray(pred_boxes).reshape(-1, 4),
        tgt_ids_all, tgt_bbox_all,
        matcher.cost_class, matcher.cost_bbox, matcher.cost_giou)
    cost_dev = jax.block_until_ready(cost_dev)
    cost_ref = _cost_matrix_reference(
        class_cost, np.asarray(pred_boxes).reshape(-1, 4),
        tgt_ids_all, tgt_bbox_all,
        matcher.cost_class, matcher.cost_bbox, matcher.cost_giou)
    np.testing.assert_allclose(np.asarray(cost_dev), cost_ref,
                               rtol=2e-2, atol=2e-2)

    # --- full forward (Hungarian + track-query bookkeeping on host) --------
    result = matcher(outputs, targets)
    assert len(result) == batch_size
    for b, (pred_idx, tgt_idx) in enumerate(result):
        assert pred_idx.dtype == np.int64 and tgt_idx.dtype == np.int64
        assert len(pred_idx) == len(tgt_idx) == min(num_queries, sizes[b])
    # track queries 0 and 1 must be forced onto targets 0 and 2 of sample 0
    pairs0 = set(zip(result[0][0].tolist(), result[0][1].tolist()))
    assert (0, 0) in pairs0 and (1, 2) in pairs0

    print("KERNEL_OK")
</pallas_src>

<mosaic_0001>
module attributes {stable_mosaic.version = 11 : i64} {
  func.func @_cost_kernel(%arg0: i32, %arg1: i32, %arg2: memref<16x128xf32, #tpu.memory_space<vmem>>, %arg3: memref<128x128xf32, #tpu.memory_space<vmem>>, %arg4: memref<16x4xf32, #tpu.memory_space<vmem>>, %arg5: memref<4x128xf32, #tpu.memory_space<vmem>>, %arg6: memref<16x128xf32, #tpu.memory_space<vmem>>) attributes {dimension_semantics = [#tpu.dimension_semantics<parallel>, #tpu.dimension_semantics<parallel>], iteration_bounds = array<i64: 1, 1>, scalar_prefetch = 0 : i64, scratch_operands = 0 : i64, tpu.core_type = #tpu.core_type<tc>, window_params = [{transform_indices = @transform_0, window_bounds = array<i64: 16, 128>}, {transform_indices = @transform_1, window_bounds = array<i64: 128, 128>}, {transform_indices = @transform_2, window_bounds = array<i64: 16, 4>}, {transform_indices = @transform_3, window_bounds = array<i64: 4, 128>}, {transform_indices = @transform_4, window_bounds = array<i64: 16, 128>}]} {
    %c0 = arith.constant 0 : index
    %c0_0 = arith.constant 0 : index
    %0 = vector.load %arg2[%c0, %c0_0] : memref<16x128xf32, #tpu.memory_space<vmem>>, vector<16x128xf32>
    %c0_1 = arith.constant 0 : index
    %c0_2 = arith.constant 0 : index
    %1 = vector.load %arg3[%c0_1, %c0_2] : memref<128x128xf32, #tpu.memory_space<vmem>>, vector<128x128xf32>
    %cst = arith.constant dense<0.000000e+00> : vector<16x128xf32>
    %2 = tpu.matmul %0, %1, %cst {dimension_numbers = #tpu.dot_dimension_numbers<[1], [0], [0], [1], [0, 0, 1, 1], [], []>} : vector<16x128xf32>, vector<128x128xf32>, vector<16x128xf32> -> vector<16x128xf32>
    %c0_3 = arith.constant 0 : index
    %c0_4 = arith.constant 0 : index
    %3 = vector.load %arg4[%c0_3, %c0_4] : memref<16x4xf32, #tpu.memory_space<vmem>>, vector<16x4xf32>
    %c0_5 = arith.constant 0 : index
    %c0_6 = arith.constant 0 : index
    %4 = vector.load %arg5[%c0_5, %c0_6] : memref<4x128xf32, #tpu.memory_space<vmem>>, vector<4x128xf32>
    %5 = vector.extract_strided_slice %3 {offsets = [0, 0], sizes = [16, 1], strides = [1, 1]} : vector<16x4xf32> to vector<16x1xf32>
    %6 = vector.extract_strided_slice %3 {offsets = [0, 1], sizes = [16, 1], strides = [1, 1]} : vector<16x4xf32> to vector<16x1xf32>
    %7 = vector.extract_strided_slice %3 {offsets = [0, 2], sizes = [16, 1], strides = [1, 1]} : vector<16x4xf32> to vector<16x1xf32>
    %8 = vector.extract_strided_slice %3 {offsets = [0, 3], sizes = [16, 1], strides = [1, 1]} : vector<16x4xf32> to vector<16x1xf32>
    %9 = vector.extract_strided_slice %4 {offsets = [0, 0], sizes = [1, 128], strides = [1, 1]} : vector<4x128xf32> to vector<1x128xf32>
    %10 = vector.extract_strided_slice %4 {offsets = [1, 0], sizes = [1, 128], strides = [1, 1]} : vector<4x128xf32> to vector<1x128xf32>
    %11 = vector.extract_strided_slice %4 {offsets = [2, 0], sizes = [1, 128], strides = [1, 1]} : vector<4x128xf32> to vector<1x128xf32>
    %12 = vector.extract_strided_slice %4 {offsets = [3, 0], sizes = [1, 128], strides = [1, 1]} : vector<4x128xf32> to vector<1x128xf32>
    %cst_7 = arith.constant 5.000000e-01 : f32
    %13 = vector.broadcast %cst_7 : f32 to vector<16x1xf32>
    %14 = arith.mulf %13, %7 : vector<16x1xf32>
    %15 = arith.subf %5, %14 : vector<16x1xf32>
    %cst_8 = arith.constant 5.000000e-01 : f32
    %16 = vector.broadcast %cst_8 : f32 to vector<16x1xf32>
    %17 = arith.mulf %16, %8 : vector<16x1xf32>
    %18 = arith.subf %6, %17 : vector<16x1xf32>
    %cst_9 = arith.constant 5.000000e-01 : f32
    %19 = vector.broadcast %cst_9 : f32 to vector<16x1xf32>
    %20 = arith.mulf %19, %7 : vector<16x1xf32>
    %21 = arith.addf %5, %20 : vector<16x1xf32>
    %cst_10 = arith.constant 5.000000e-01 : f32
    %22 = vector.broadcast %cst_10 : f32 to vector<16x1xf32>
    %23 = arith.mulf %22, %8 : vector<16x1xf32>
    %24 = arith.addf %6, %23 : vector<16x1xf32>
    %25 = arith.mulf %7, %8 : vector<16x1xf32>
    %cst_11 = arith.constant 5.000000e-01 : f32
    %26 = vector.broadcast %cst_11 : f32 to vector<1x128xf32>
    %27 = arith.mulf %26, %11 : vector<1x128xf32>
    %28 = arith.subf %9, %27 : vector<1x128xf32>
    %cst_12 = arith.constant 5.000000e-01 : f32
    %29 = vector.broadcast %cst_12 : f32 to vector<1x128xf32>
    %30 = arith.mulf %29, %12 : vector<1x128xf32>
    %31 = arith.subf %10, %30 : vector<1x128xf32>
    %cst_13 = arith.constant 5.000000e-01 : f32
    %32 = vector.broadcast %cst_13 : f32 to vector<1x128xf32>
    %33 = arith.mulf %32, %11 : vector<1x128xf32>
    %34 = arith.addf %9, %33 : vector<1x128xf32>
    %cst_14 = arith.constant 5.000000e-01 : f32
    %35 = vector.broadcast %cst_14 : f32 to vector<1x128xf32>
    %36 = arith.mulf %35, %12 : vector<1x128xf32>
    %37 = arith.addf %10, %36 : vector<1x128xf32>
    %38 = arith.mulf %11, %12 : vector<1x128xf32>
    %39 = vector.shape_cast %5 : vector<16x1xf32> to vector<16x1xf32>
    %40 = vector.broadcast %39 : vector<16x1xf32> to vector<16x128xf32>
    %41 = vector.shape_cast %6 : vector<16x1xf32> to vector<16x1xf32>
    %42 = vector.broadcast %41 : vector<16x1xf32> to vector<16x128xf32>
    %43 = vector.shape_cast %7 : vector<16x1xf32> to vector<16x1xf32>
    %44 = vector.broadcast %43 : vector<16x1xf32> to vector<16x128xf32>
    %45 = vector.shape_cast %8 : vector<16x1xf32> to vector<16x1xf32>
    %46 = vector.broadcast %45 : vector<16x1xf32> to vector<16x128xf32>
    %47 = vector.shape_cast %15 : vector<16x1xf32> to vector<16x1xf32>
    %48 = vector.broadcast %47 : vector<16x1xf32> to vector<16x128xf32>
    %49 = vector.shape_cast %18 : vector<16x1xf32> to vector<16x1xf32>
    %50 = vector.broadcast %49 : vector<16x1xf32> to vector<16x128xf32>
    %51 = vector.shape_cast %21 : vector<16x1xf32> to vector<16x1xf32>
    %52 = vector.broadcast %51 : vector<16x1xf32> to vector<16x128xf32>
    %53 = vector.shape_cast %24 : vector<16x1xf32> to vector<16x1xf32>
    %54 = vector.broadcast %53 : vector<16x1xf32> to vector<16x128xf32>
    %55 = vector.shape_cast %25 : vector<16x1xf32> to vector<16x1xf32>
    %56 = vector.broadcast %55 : vector<16x1xf32> to vector<16x128xf32>
    %57 = vector.broadcast %9 : vector<1x128xf32> to vector<16x128xf32>
    %58 = arith.subf %40, %57 : vector<16x128xf32>
    %59 = math.absf %58 : vector<16x128xf32>
    %60 = vector.broadcast %10 : vector<1x128xf32> to vector<16x128xf32>
    %61 = arith.subf %42, %60 : vector<16x128xf32>
    %62 = math.absf %61 : vector<16x128xf32>
    %63 = arith.addf %59, %62 : vector<16x128xf32>
    %64 = vector.broadcast %11 : vector<1x128xf32> to vector<16x128xf32>
    %65 = arith.subf %44, %64 : vector<16x128xf32>
    %66 = math.absf %65 : vector<16x128xf32>
    %67 = arith.addf %63, %66 : vector<16x128xf32>
    %68 = vector.broadcast %12 : vector<1x128xf32> to vector<16x128xf32>
    %69 = arith.subf %46, %68 : vector<16x128xf32>
    %70 = math.absf %69 : vector<16x128xf32>
    %71 = arith.addf %67, %70 : vector<16x128xf32>
    %72 = vector.broadcast %28 : vector<1x128xf32> to vector<16x128xf32>
    %73 = arith.maximumf %48, %72 : vector<16x128xf32>
    %74 = vector.broadcast %31 : vector<1x128xf32> to vector<16x128xf32>
    %75 = arith.maximumf %50, %74 : vector<16x128xf32>
    %76 = vector.broadcast %34 : vector<1x128xf32> to vector<16x128xf32>
    %77 = arith.minimumf %52, %76 : vector<16x128xf32>
    %78 = vector.broadcast %37 : vector<1x128xf32> to vector<16x128xf32>
    %79 = arith.minimumf %54, %78 : vector<16x128xf32>
    %80 = arith.subf %77, %73 : vector<16x128xf32>
    %cst_15 = arith.constant 0.000000e+00 : f32
    %81 = vector.broadcast %cst_15 : f32 to vector<16x128xf32>
    %82 = arith.maximumf %80, %81 : vector<16x128xf32>
    %83 = arith.subf %79, %75 : vector<16x128xf32>
    %cst_16 = arith.constant 0.000000e+00 : f32
    %84 = vector.broadcast %cst_16 : f32 to vector<16x128xf32>
    %85 = arith.maximumf %83, %84 : vector<16x128xf32>
    %86 = arith.mulf %82, %85 : vector<16x128xf32>
    %87 = vector.broadcast %38 : vector<1x128xf32> to vector<16x128xf32>
    %88 = arith.addf %56, %87 : vector<16x128xf32>
    %89 = arith.subf %88, %86 : vector<16x128xf32>
    %90 = tpu.reciprocal %89 {approx = true} : vector<16x128xf32> -> vector<16x128xf32>
    %91 = arith.mulf %86, %90 : vector<16x128xf32>
    %92 = vector.broadcast %28 : vector<1x128xf32> to vector<16x128xf32>
    %93 = arith.minimumf %48, %92 : vector<16x128xf32>
    %94 = vector.broadcast %31 : vector<1x128xf32> to vector<16x128xf32>
    %95 = arith.minimumf %50, %94 : vector<16x128xf32>
    %96 = vector.broadcast %34 : vector<1x128xf32> to vector<16x128xf32>
    %97 = arith.maximumf %52, %96 : vector<16x128xf32>
    %98 = vector.broadcast %37 : vector<1x128xf32> to vector<16x128xf32>
    %99 = arith.maximumf %54, %98 : vector<16x128xf32>
    %100 = arith.subf %97, %93 : vector<16x128xf32>
    %101 = arith.subf %99, %95 : vector<16x128xf32>
    %102 = arith.mulf %100, %101 : vector<16x128xf32>
    %103 = arith.subf %102, %89 : vector<16x128xf32>
    %104 = tpu.reciprocal %102 {approx = true} : vector<16x128xf32> -> vector<16x128xf32>
    %105 = arith.mulf %103, %104 : vector<16x128xf32>
    %106 = arith.subf %91, %105 : vector<16x128xf32>
    %cst_17 = arith.constant 5.000000e+00 : f32
    %107 = vector.broadcast %cst_17 : f32 to vector<16x128xf32>
    %108 = arith.mulf %107, %71 : vector<16x128xf32>
    %cst_18 = arith.constant 1.000000e+00 : f32
    %109 = vector.broadcast %cst_18 : f32 to vector<16x128xf32>
    %110 = arith.mulf %109, %2 : vector<16x128xf32>
    %111 = arith.addf %108, %110 : vector<16x128xf32>
    %cst_19 = arith.constant 0.000000e+00 : f32
    %112 = vector.broadcast %cst_19 : f32 to vector<16x128xf32>
    %113 = arith.subf %112, %106 : vector<16x128xf32>
    %cst_20 = arith.constant 2.000000e+00 : f32
    %114 = vector.broadcast %cst_20 : f32 to vector<16x128xf32>
    %115 = arith.mulf %114, %113 : vector<16x128xf32>
    %116 = arith.addf %111, %115 : vector<16x128xf32>
    %c0_21 = arith.constant 0 : index
    %c0_22 = arith.constant 0 : index
    %117 = vector.load %arg6[%c0_21, %c0_22] : memref<16x128xf32, #tpu.memory_space<vmem>>, vector<16x128xf32>
    tpu.vector_store %arg6[%c0_21, %c0_22], %116 {strides = array<i32>} : memref<16x128xf32, #tpu.memory_space<vmem>>, vector<16x128xf32>,
    return
  }
  func.func @transform_0(%arg0: i32, %arg1: i32) -> (i32, i32) {
    %c0_i32 = arith.constant 0 : i32
    %c0_i32_0 = arith.constant 0 : i32
    return %arg0, %c0_i32 : i32, i32
  }
  func.func @transform_1(%arg0: i32, %arg1: i32) -> (i32, i32) {
    %c0_i32 = arith.constant 0 : i32
    %c0_i32_0 = arith.constant 0 : i32
    return %c0_i32, %arg1 : i32, i32
  }
  func.func @transform_2(%arg0: i32, %arg1: i32) -> (i32, i32) {
    %c0_i32 = arith.constant 0 : i32
    %c0_i32_0 = arith.constant 0 : i32
    return %arg0, %c0_i32 : i32, i32
  }
  func.func @transform_3(%arg0: i32, %arg1: i32) -> (i32, i32) {
    %c0_i32 = arith.constant 0 : i32
    %c0_i32_0 = arith.constant 0 : i32
    return %c0_i32, %arg1 : i32, i32
  }
  func.func @transform_4(%arg0: i32, %arg1: i32) -> (i32, i32) {
    %c0_i32 = arith.constant 0 : i32
    return %arg0, %arg1 : i32, i32
  }
}

</mosaic_0001>

<llo_original>
// kernel: tpu_custom_call.1
$region0: #{tpu_custom_call.1}
  #allocation0 [shape = 'u32[]', space=smem, size = 0x4, offset = 0x4, fixed_abs, tag = 'smem constant byte address 0x4 - core index']
  #allocation1 [shape = 'u32[144,128]{1,0:T(1,128)}', space=vmem, size = 0x12000, scoped, tag = 'internal scratch']
  %s0 = inlined_call_operand.vmem [shape: f32[16,128], index: 0, kind: input, shape index: {}]
  %s1 = inlined_call_operand.hbm [shape: f32[128,128], index: 1, kind: input, shape index: {}]
  %s2 = inlined_call_operand.vmem [shape: f32[16,4], index: 2, kind: input, shape index: {}]
  %s3 = inlined_call_operand.vmem [shape: f32[4,128], index: 3, kind: input, shape index: {}]
  %s4 = inlined_call_operand.hbm [shape: f32[16,128], index: 4, kind: output, shape index: {}]
  %s5 = sld [smem:[#allocation0]]
  $region30: #{tpu_custom_call.1} parent=0
    _
  %s7 = ssub.s32 1, %s5
  %s8 = scalar_select 0, %s7, %s5
  $region1: #{tpu_custom_call.1} parent=0
    #allocation2 [shape = 'u8[65536]{0}', space=vmem, size = 0x10000, scoped, tag = 'input window, operand 1, single buffered']
    #allocation3 [shape = 's32[1]{0}', space=sflag, size = 0x4, scoped, tag = 'scoped memory for tpu_custom_call.1']
    #allocation4 [shape = 's32[1]{0}', space=sflag, size = 0x4, scoped, tag = 'scoped memory for tpu_custom_call.1']
    #allocation5 [shape = 'u8[8192]{0}', space=vmem, size = 0x2000, scoped, tag = 'output window, operand 0, single buffered']
    %9 = vsyncpa [#allocation3], 0
    %10 = vsyncpa [#allocation4], 0
    // Predicated region
    $region2: #{tpu_custom_call.1} parent=1 // pred_check
      _
    $region3: #{tpu_custom_call.1} parent=1 // pred_check_branch
      %12 = sbr.rel (0) target = $region5
    $region4: #{tpu_custom_call.1} parent=1 // pred_region
      _
    $region5: #{tpu_custom_call.1} parent=1 // pred_fallthru
      _
    // Predicated region
    $region6: #{tpu_custom_call.1} parent=1 // pred_check
      _
    $region7: #{tpu_custom_call.1} parent=1 // pred_check_branch
      %14 = sbr.rel (0) target = $region9
    $region8: #{tpu_custom_call.1} parent=1 // pred_region
      %s16 = ssub.s32 2048, 2048
      %17 = vsyncadd [#allocation3], %s16
      %s18 = sshll.u32 [#allocation2], 4
      %s19 = int_to_ptr.vmem [resolvable:$true] %s18
      %24 = dma.hbm_to_vmem [thread:$0]  %s1, 2048, %s19, [#allocation3], 128, 128, 8
    $region9: #{tpu_custom_call.1} parent=1 // pred_fallthru
      _
    // Predicated region
    $region10: #{tpu_custom_call.1} parent=1 // pred_check
      _
    $region11: #{tpu_custom_call.1} parent=1 // pred_check_branch
      %26 = sbr.rel (0) target = $region13
    $region12: #{tpu_custom_call.1} parent=1 // pred_region
      _
    $region13: #{tpu_custom_call.1} parent=1 // pred_fallthru
      _
    // Predicated region
    $region14: #{tpu_custom_call.1} parent=1 // pred_check
      _
    $region15: #{tpu_custom_call.1} parent=1 // pred_check_branch
      %28 = sbr.rel (0) target = $region17
    $region16: #{tpu_custom_call.1} parent=1 // pred_region
      _
    $region17: #{tpu_custom_call.1} parent=1 // pred_fallthru
      _
    // Predicated region
    $region18: #{tpu_custom_call.1} parent=1 // pred_check
      _
    $region19: #{tpu_custom_call.1} parent=1 // pred_check_branch
      %30 = sbr.rel (0) target = $region21
    $region20: #{tpu_custom_call.1} parent=1 // pred_region
      %31 = dma.done [#allocation3], 2048
    $region21: #{tpu_custom_call.1} parent=1 // pred_fallthru
      _
    %v32 = vld [vmem:[%s0] sm:$0xff]
    %v33 = vld [vmem:[%s0 + $0x8] sm:$0xff]
    %v34 = vld [vmem:[#allocation2] sm:$0xff]
    %v35 = vld [vmem:[#allocation2 + $0x8] sm:$0xff]
    %v36 = vld [vmem:[#allocation2 + $0x10] sm:$0xff]
    %v37 = vld [vmem:[#allocation2 + $0x18] sm:$0xff]
    %v38 = vld [vmem:[#allocation2 + $0x20] sm:$0xff]
    %v39 = vld [vmem:[#allocation2 + $0x28] sm:$0xff]
    %v40 = vld [vmem:[#allocation2 + $0x30] sm:$0xff]
    %v41 = vld [vmem:[#allocation2 + $0x38] sm:$0xff]
    %v42 = vld [vmem:[#allocation2 + $0x40] sm:$0xff]
    %v43 = vld [vmem:[#allocation2 + $0x48] sm:$0xff]
    %v44 = vld [vmem:[#allocation2 + $0x50] sm:$0xff]
    %v45 = vld [vmem:[#allocation2 + $0x58] sm:$0xff]
    %v46 = vld [vmem:[#allocation2 + $0x60] sm:$0xff]
    %v47 = vld [vmem:[#allocation2 + $0x68] sm:$0xff]
    %v48 = vld [vmem:[#allocation2 + $0x70] sm:$0xff]
    %v49 = vld [vmem:[#allocation2 + $0x78] sm:$0xff]
    %50 = vmatprep.subr.mxu0 0.0
    %51 = vmatpush1.msra.mxu0 %v49
    %52 = vmatprep.subr.mxu0 0.0
    %53 = vmatpush1.msra.mxu0 %v48
    %54 = vmatprep.subr.mxu0 0.0
    %55 = vmatpush1.msra.mxu0 %v47
    %56 = vmatprep.subr.mxu0 0.0
    %57 = vmatpush1.msra.mxu0 %v46
    %58 = vmatprep.subr.mxu0 0.0
    %59 = vmatpush1.msra.mxu0 %v45
    %60 = vmatprep.subr.mxu0 0.0
    %61 = vmatpush1.msra.mxu0 %v44
    %62 = vmatprep.subr.mxu0 0.0
    %63 = vmatpush1.msra.mxu0 %v43
    %64 = vmatprep.subr.mxu0 0.0
    %65 = vmatpush1.msra.mxu0 %v42
    %66 = vmatprep.subr.mxu0 0.0
    %67 = vmatpush1.msra.mxu0 %v41
    %68 = vmatprep.subr.mxu0 0.0
    %69 = vmatpush1.msra.mxu0 %v40
    %70 = vmatprep.subr.mxu0 0.0
    %71 = vmatpush1.msra.mxu0 %v39
    %72 = vmatprep.subr.mxu0 0.0
    %73 = vmatpush1.msra.mxu0 %v38
    %74 = vmatprep.subr.mxu0 0.0
    %75 = vmatpush1.msra.mxu0 %v37
    %76 = vmatprep.subr.mxu0 0.0
    %77 = vmatpush1.msra.mxu0 %v36
    %78 = vmatprep.subr.mxu0 0.0
    %79 = vmatpush1.msra.mxu0 %v35
    %80 = vmatprep.subr.mxu0 0.0
    %81 = vmatpush1.msra.mxu0 %v34
    %82 = vmatprep.subr.mxu0 0.0
    %83 = vmatpush2.msra.mxu0 0.0
    %84 = vmatprep.subr.mxu0 0.0
    %85 = vmatpush2.msra.mxu0 0.0
    %86 = vmatprep.subr.mxu0 0.0
    %87 = vmatpush2.msra.mxu0 0.0
    %88 = vmatprep.subr.mxu0 0.0
    %89 = vmatpush2.msra.mxu0 0.0
    %90 = vmatprep.subr.mxu0 0.0
    %91 = vmatpush2.msra.mxu0 0.0
    %92 = vmatprep.subr.mxu0 0.0
    %93 = vmatpush2.msra.mxu0 0.0
    %94 = vmatprep.subr.mxu0 0.0
    %95 = vmatpush2.msra.mxu0 0.0
    %96 = vmatprep.subr.mxu0 0.0
    %97 = vmatpush2.msra.mxu0 0.0
    %98 = vmatprep.subr.mxu0 0.0
    %99 = vmatpush2.msra.mxu0 0.0
    %100 = vmatprep.subr.mxu0 0.0
    %101 = vmatpush2.msra.mxu0 0.0
    %102 = vmatprep.subr.mxu0 0.0
    %103 = vmatpush2.msra.mxu0 0.0
    %104 = vmatprep.subr.mxu0 0.0
    %105 = vmatpush2.msra.mxu0 0.0
    %106 = vmatprep.subr.mxu0 0.0
    %107 = vmatpush2.msra.mxu0 0.0
    %108 = vmatprep.subr.mxu0 0.0
    %109 = vmatpush2.msra.mxu0 0.0
    %110 = vmatprep.subr.mxu0 0.0
    %111 = vmatpush2.msra.mxu0 0.0
    %112 = vmatprep.subr.mxu0 0.0
    %113 = vmatpush2.msra.mxu0 0.0
    %114 = vmatprep.mubr.f32.mxu0 0.0
    %115 = vmatmul.mubr.f32.gmra.mxu0 %v32
    %v116 = vpop.f32.mrf.mxu0
    %v117 = vadd.f32 0.0, %v116
    %v118 = vpop.f32.mrf.mxu0
    %119 = vmatprep.mubr.f32.mxu0 0.0
    %120 = vmatmul.mubr.f32.gmra.mxu0 %v33
    %v121 = vpop.f32.mrf.mxu0
    %v122 = vadd.f32 0.0, %v121
    %v123 = vpop.f32.mrf.mxu0
    %124 = vdwg.mxu0
    %v125 = vld [vmem:[%s2] sm:$0xff]
    %v126 = vld [vmem:[%s2 + $0x8] sm:$0xff]
    %v127 = vld [vmem:[%s3] sm:$0xf]
    %v128 = vmul.f32 %v125, 0.5
    %v129 = vmul.f32 %v126, 0.5
    %132 = vrot.lane.b32.xlu0 %v128, 126
    %v133 = vpop.permute.xlu0 %132
    %134 = vrot.lane.b32.xlu0 %v129, 126
    %v135 = vpop.permute.xlu0 %134
    %v138 = vsub.f32 %v125, %v133
    %v139 = vsub.f32 %v126, %v135
    %v140 = vadd.f32 %v125, %v133
    %v141 = vadd.f32 %v126, %v135
    %144 = vrot.lane.b32.xlu0 %v125, 127
    %v145 = vpop.permute.xlu0 %144
    %146 = vrot.lane.b32.xlu0 %v126, 127
    %v147 = vpop.permute.xlu0 %146
    %v150 = vmul.f32 %v125, %v145
    %v151 = vmul.f32 %v126, %v147
    %v152 = vmul.f32 %v127, 0.5
    %v154 = vrot.slane %v152, 2
    %v156 = vsub.f32 %v127, %v154
    %v157 = vadd.f32 %v127, %v154
    %v159 = vrot.slane %v127, 1
    %v161 = vmul.f32 %v127, %v159
    %162 = vset.pattern.permute.xlu0 0
    %163 = vperm.xlu0 %162, %v125
    %v164 = vpop.permute.xlu0 %163
    %166 = vset.pattern.permute.xlu0 0
    %167 = vperm.xlu0 %166, %v126
    %v168 = vpop.permute.xlu0 %167
    %170 = vset.pattern.permute.xlu0 1
    %171 = vperm.xlu0 %170, %v125
    %v172 = vpop.permute.xlu0 %171
    %174 = vset.pattern.permute.xlu0 1
    %175 = vperm.xlu0 %174, %v126
    %v176 = vpop.permute.xlu0 %175
    %178 = vset.pattern.permute.xlu0 2
    %179 = vperm.xlu0 %178, %v125
    %v180 = vpop.permute.xlu0 %179
    %182 = vset.pattern.permute.xlu0 2
    %183 = vperm.xlu0 %182, %v126
    %v184 = vpop.permute.xlu0 %183
    %186 = vset.pattern.permute.xlu0 3
    %187 = vperm.xlu0 %186, %v125
    %v188 = vpop.permute.xlu0 %187
    %190 = vset.pattern.permute.xlu0 3
    %191 = vperm.xlu0 %190, %v126
    %v192 = vpop.permute.xlu0 %191
    %195 = vset.pattern.permute.xlu0 0
    %196 = vperm.xlu0 %195, %v138
    %v197 = vpop.permute.xlu0 %196
    %200 = vset.pattern.permute.xlu0 0
    %201 = vperm.xlu0 %200, %v139
    %v202 = vpop.permute.xlu0 %201
    %204 = vset.pattern.permute.xlu0 1
    %205 = vperm.xlu0 %204, %v138
    %v206 = vpop.permute.xlu0 %205
    %208 = vset.pattern.permute.xlu0 1
    %209 = vperm.xlu0 %208, %v139
    %v210 = vpop.permute.xlu0 %209
    %213 = vset.pattern.permute.xlu0 0
    %214 = vperm.xlu0 %213, %v140
    %v215 = vpop.permute.xlu0 %214
    %218 = vset.pattern.permute.xlu0 0
    %219 = vperm.xlu0 %218, %v141
    %v220 = vpop.permute.xlu0 %219
    %222 = vset.pattern.permute.xlu0 1
    %223 = vperm.xlu0 %222, %v140
    %v224 = vpop.permute.xlu0 %223
    %226 = vset.pattern.permute.xlu0 1
    %227 = vperm.xlu0 %226, %v141
    %v228 = vpop.permute.xlu0 %227
    %231 = vset.pattern.permute.xlu0 2
    %232 = vperm.xlu0 %231, %v150
    %v233 = vpop.permute.xlu0 %232
    %236 = vset.pattern.permute.xlu0 2
    %237 = vperm.xlu0 %236, %v151
    %v238 = vpop.permute.xlu0 %237
    %v240 = vlaneseq
    %v241 = vshrl.u32 %v240, 7
    %v242 = vsub.s32 0, %v241
    %v243 = vrot.slane %v127, %v242
    %v244 = vsub.f32 %v164, %v243
    %v245 = vsub.f32 %v168, %v243
    %v246 = vand.u32 2147483647, %v244
    %v247 = vand.u32 2147483647, %v245
    %v248 = vlaneseq
    %v249 = vshrl.u32 %v248, 7
    %v250 = vsub.s32 1, %v249
    %v251 = vrot.slane %v127, %v250
    %v252 = vsub.f32 %v172, %v251
    %v253 = vsub.f32 %v176, %v251
    %v254 = vand.u32 2147483647, %v252
    %v255 = vand.u32 2147483647, %v253
    %v256 = vadd.f32 %v246, %v254
    %v257 = vadd.f32 %v247, %v255
    %v258 = vlaneseq
    %v259 = vshrl.u32 %v258, 7
    %v260 = vsub.s32 2, %v259
    %v261 = vrot.slane %v127, %v260
    %v262 = vsub.f32 %v180, %v261
    %v263 = vsub.f32 %v184, %v261
    %v264 = vand.u32 2147483647, %v262
    %v265 = vand.u32 2147483647, %v263
    %v266 = vadd.f32 %v256, %v264
    %v267 = vadd.f32 %v257, %v265
    %v268 = vlaneseq
    %v269 = vshrl.u32 %v268, 7
    %v270 = vsub.s32 3, %v269
    %v271 = vrot.slane %v127, %v270
    %v272 = vsub.f32 %v188, %v271
    %v273 = vsub.f32 %v192, %v271
    %v274 = vand.u32 2147483647, %v272
    %v275 = vand.u32 2147483647, %v273
    %v276 = vadd.f32 %v266, %v274
    %v277 = vadd.f32 %v267, %v275
    %v278 = vlaneseq
    %v279 = vshrl.u32 %v278, 7
    %v280 = vsub.s32 0, %v279
    %v281 = vrot.slane %v156, %v280
    %v282 = vmax.f32 %v197, %v281
    %v283 = vmax.f32 %v202, %v281
    %v284 = vlaneseq
    %v285 = vshrl.u32 %v284, 7
    %v286 = vsub.s32 1, %v285
    %v287 = vrot.slane %v156, %v286
    %v288 = vmax.f32 %v206, %v287
    %v289 = vmax.f32 %v210, %v287
    %v290 = vlaneseq
    %v291 = vshrl.u32 %v290, 7
    %v292 = vsub.s32 0, %v291
    %v293 = vrot.slane %v157, %v292
    %v294 = vmin.f32 %v215, %v293
    %v295 = vmin.f32 %v220, %v293
    %v296 = vlaneseq
    %v297 = vshrl.u32 %v296, 7
    %v298 = vsub.s32 1, %v297
    %v299 = vrot.slane %v157, %v298
    %v300 = vmin.f32 %v224, %v299
    %v301 = vmin.f32 %v228, %v299
    %v302 = vsub.f32 %v294, %v282
    %v303 = vsub.f32 %v295, %v283
    %v304 = vmax.f32 %v302, 0.0
    %v305 = vmax.f32 %v303, 0.0
    %v306 = vsub.f32 %v300, %v288
    %v307 = vsub.f32 %v301, %v289
    %v308 = vmax.f32 %v306, 0.0
    %v309 = vmax.f32 %v307, 0.0
    %v310 = vmul.f32 %v304, %v308
    %v311 = vmul.f32 %v305, %v309
    %v312 = vlaneseq
    %v313 = vshrl.u32 %v312, 7
    %v314 = vsub.s32 2, %v313
    %v315 = vrot.slane %v161, %v314
    %v316 = vadd.f32 %v233, %v315
    %v317 = vadd.f32 %v238, %v315
    %v318 = vsub.f32 %v316, %v310
    %v319 = vsub.f32 %v317, %v311
    %v320 = vrcp.pop %v318
    %v321 = vrcp.pop %v319
    %v322 = vmul.f32 %v310, %v320
    %v323 = vmul.f32 %v311, %v321
    %v324 = vmin.f32 %v197, %v281
    %v325 = vmin.f32 %v202, %v281
    %v326 = vmin.f32 %v206, %v287
    %v327 = vmin.f32 %v210, %v287
    %v328 = vmax.f32 %v215, %v293
    %v329 = vmax.f32 %v220, %v293
    %v330 = vmax.f32 %v224, %v299
    %v331 = vmax.f32 %v228, %v299
    %v332 = vsub.f32 %v328, %v324
    %v333 = vsub.f32 %v329, %v325
    %v334 = vsub.f32 %v330, %v326
    %v335 = vsub.f32 %v331, %v327
    %v336 = vmul.f32 %v332, %v334
    %v337 = vmul.f32 %v333, %v335
    %v338 = vsub.f32 %v336, %v318
    %v339 = vsub.f32 %v337, %v319
    %v340 = vrcp.pop %v336
    %v341 = vrcp.pop %v337
    %v342 = vmul.f32 %v338, %v340
    %v343 = vmul.f32 %v339, %v341
    %v344 = vsub.f32 %v322, %v342
    %v345 = vsub.f32 %v323, %v343
    %v346 = vmul.f32 %v276, 5.0
    %v347 = vmul.f32 %v277, 5.0
    %v348 = vadd.f32 %v346, %v117
    %v349 = vadd.f32 %v347, %v122
    %v350 = vsub.f32 0.0, %v344
    %v351 = vsub.f32 0.0, %v345
    %v352 = vmul.f32 %v350, 2.0
    %v353 = vmul.f32 %v351, 2.0
    %v354 = vadd.f32 %v348, %v352
    %v355 = vadd.f32 %v349, %v353
    %356 = vst [vmem:[#allocation5] sm:$0xff] %v354
    %357 = vst [vmem:[#allocation5 + $0x8] sm:$0xff] %v355
    // Predicated region
    $region22: #{tpu_custom_call.1} parent=1 // pred_check
      _
    $region23: #{tpu_custom_call.1} parent=1 // pred_check_branch
      %359 = sbr.rel (0) target = $region25
    $region24: #{tpu_custom_call.1} parent=1 // pred_region
      %s361 = ssub.s32 256, 256
      %362 = vsyncadd [#allocation4], %s361
      %s363 = sshll.u32 [#allocation5], 4
      %s364 = int_to_ptr.vmem [resolvable:$true] %s363
      %369 = dma.vmem_to_hbm [thread:$0]  %s364, 256, %s4, [#allocation4], 128, 128, 8
    $region25: #{tpu_custom_call.1} parent=1 // pred_fallthru
      _
    // Predicated region
    $region26: #{tpu_custom_call.1} parent=1 // pred_check
      _
    $region27: #{tpu_custom_call.1} parent=1 // pred_check_branch
      %371 = sbr.rel (0) target = $region29
    $region28: #{tpu_custom_call.1} parent=1 // pred_region
      %372 = dma.done [#allocation4], 256
    $region29: #{tpu_custom_call.1} parent=1 // pred_fallthru
      _
    %373 = vsyncpa [#allocation3], 1
    %374 = vsyncpa [#allocation4], 1

</llo_original>
